<compile_context>
chip_gen: v6e
topology: v6e:2x2x1
jax: 0.10.0
libtpu: 0.0.40
codegen_flags: <defaults>
</compile_context>

<pallas_src>
import functools

import jax
import jax.numpy as jnp
from jax.experimental import pallas as pl
from jax.experimental.pallas import tpu as pltpu


def _obf_kernel(x_ref, tgt_ref, out_ref,
                sx_ref, spx_ref, xt_ref, pt_ref, acc_ref,
                *, C, gamma, use_sigmoid, n_classes, tn):
    i = pl.program_id(1)          # batch-tile index within this core's slice
    j = pl.program_id(2)          # class-tile index (reduction axis, innermost)
    n_bt = pl.num_programs(1)
    n_ct = pl.num_programs(2)

    # Reset the per-core batch accumulator at the start of this core's slice.
    @pl.when(jnp.logical_and(i == 0, j == 0))
    def _():
        acc_ref[...] = jnp.zeros_like(acc_ref)

    # Reset per-row partial sums at the start of every batch tile.
    @pl.when(j == 0)
    def _():
        sx_ref[...] = jnp.zeros_like(sx_ref)
        spx_ref[...] = jnp.zeros_like(spx_ref)
        xt_ref[...] = jnp.zeros_like(xt_ref)
        pt_ref[...] = jnp.zeros_like(pt_ref)

    x = x_ref[...].astype(jnp.float32)                      # (tb, tn), cast in VMEM
    tgt = tgt_ref[...]                                       # (tb, 1) int32

    # Masked selection of the target column (global column index = j*tn + lane).
    cols = jax.lax.broadcasted_iota(jnp.int32, x.shape, 1) + j * tn
    is_tgt = cols == tgt                                     # (tb, tn) bool

    if use_sigmoid:
        pred = jax.nn.sigmoid(x)                             # EUP
    else:
        # Softmax over the full class dim (wrapper forces tn == n_classes here).
        m = jnp.max(x, axis=-1, keepdims=True)
        e = jnp.exp(x - m)
        denom = jnp.sum(e, axis=-1, keepdims=True)
        # approx=True would move the divide to the otherwise-idle EUP slot; kept
        # exact since this kernel is HBM-bound, not VALU-bound.
        pred = e * pl.reciprocal(denom, approx=False)

    sx_ref[...] += jnp.sum(x, axis=-1, keepdims=True)
    spx_ref[...] += jnp.sum(pred * x, axis=-1, keepdims=True)
    xt_ref[...] += jnp.sum(jnp.where(is_tgt, x, 0.0), axis=-1, keepdims=True)
    pt_ref[...] += jnp.sum(jnp.where(is_tgt, pred, 0.0), axis=-1, keepdims=True)

    # Finalize this batch tile once the last class chunk has been folded in.
    @pl.when(j == n_ct - 1)
    def _():
        if C > 0:
            p_t = jnp.maximum(pt_ref[...], 1.0 / C)          # clamp(min=1/C)
            alpha = (C - 1.0 / p_t) / (C - 1.0) * gamma
        else:
            alpha = jnp.float32(gamma)
        row = (sx_ref[...] * (1.0 / n_classes)
               - alpha * spx_ref[...]
               - (1.0 - alpha) * xt_ref[...])
        acc_ref[...] += row

    # One lane reduce + one lane-dense output write per core, at the very end.
    @pl.when(jnp.logical_and(i == n_bt - 1, j == n_ct - 1))
    def _():
        total = jnp.sum(acc_ref[...])
        out_ref[...] = jnp.broadcast_to(total, out_ref.shape)


def _pick_class_tile(N, itemsize):
    # Keep full rows unless a single row is so wide that >=8-row tiles would blow
    # the ~2 MiB tile budget; class tiles must be lane-dense (multiples of 128).
    max_row_bytes = 256 * 1024
    if N * itemsize <= max_row_bytes or N % 128 != 0:
        return N
    for cand in (8192, 4096, 2048, 1024, 512, 256, 128):
        if N % cand == 0 and cand * itemsize <= max_row_bytes:
            return cand
    return N


def _pick_batch_tile(B, tn, itemsize, target_bytes=2 << 20):
    # ~2 MiB per x tile (double-buffered by the BlockSpec pipeline): large enough
    # to sit near the HBM roofline, small enough for the scoped VMEM limit on all
    # of v5e / v6e / v7x.
    rows = max(8, target_bytes // max(1, tn * itemsize))
    tb = min(B, rows)
    tb -= tb % 8
    while tb >= 8 and B % tb != 0:
        tb -= 8
    if tb < 8 or B % tb != 0:
        tb = B    # full-batch block (block dim == full array dim is always legal)
    return tb


def output_bias_forget(x, target, *, C=2.0, gamma=1.0, sigmoid=True,
                       tb=None, tn=None, n_par=None):
    """Pallas TPU implementation of OutputBiasForget.forward.

    x: [B, N] logits (any float dtype; streamed in native dtype, math in f32).
    target: [B] integer labels in [0, N).  Returns a scalar float32 loss.
    """
    assert not (0.0 <= C <= 1.0)
    assert 0.0 <= gamma <= 1.0
    B, N = x.shape
    itemsize = jnp.dtype(x.dtype).itemsize

    # --- tiling --------------------------------------------------------------
    if not sigmoid:
        # Softmax needs the full class dim in a single block.
        # TODO(synk): online-normalizer class tiling for vocab-scale softmax.
        tn = N
    if tn is None:
        tn = _pick_class_tile(N, itemsize)
    assert N % tn == 0 and (tn == N or tn % 128 == 0)

    if tb is None:
        tb = _pick_batch_tile(B, tn, itemsize)
    assert B % tb == 0 and (tb == B or tb % 8 == 0)

    n_tiles = B // tb
    if n_par is None:
        # Leading "parallel" axis shards the batch loop across TensorCores on
        # megacore parts (v7x); harmless (sequential) on single-core chips.
        n_par = 2 if (n_tiles >= 2 and n_tiles % 2 == 0) else 1
    assert n_tiles % n_par == 0
    n_bt = n_tiles // n_par
    n_ct = N // tn

    tgt2d = target.astype(jnp.int32).reshape(B, 1)

    kernel = functools.partial(
        _obf_kernel, C=float(C), gamma=float(gamma),
        use_sigmoid=bool(sigmoid), n_classes=N, tn=tn)

    # Each core writes its partial sum into its own lane-dense (8,128) block;
    # the partials are summed (and divided by B) in the wrapper.
    partials = pl.pallas_call(
        kernel,
        out_shape=jax.ShapeDtypeStruct((n_par, 8, 128), jnp.float32),
        grid_spec=pltpu.PrefetchScalarGridSpec(
            num_scalar_prefetch=0,
            grid=(n_par, n_bt, n_ct),
            in_specs=[
                # x streamed in its native dtype (no wrapper f32 upcast).
                pl.BlockSpec((tb, tn), lambda c, i, j: (c * n_bt + i, j)),
                # targets: tiny (tb,1) block; index is constant over the class
                # axis so it is only re-fetched when the batch tile changes.
                pl.BlockSpec((tb, 1), lambda c, i, j: (c * n_bt + i, 0)),
            ],
            out_specs=pl.BlockSpec((1, 8, 128), lambda c, i, j: (c, 0, 0)),
            scratch_shapes=[pltpu.VMEM((tb, 1), jnp.float32)] * 5,
        ),
        compiler_params=pltpu.CompilerParams(
            dimension_semantics=("parallel", "arbitrary", "arbitrary")),
    )(x, tgt2d)

    return jnp.sum(partials[:, 0, 0]) / B


def _reference(x, target, C=2.0, gamma=1.0, sigmoid=True):
    """Plain-JAX reference mirroring the PyTorch module."""
    x = x.astype(jnp.float32)
    B, N = x.shape
    target_oh = jax.nn.one_hot(target, N, dtype=jnp.float32)
    unif = jnp.ones_like(x) / N
    pred = jax.nn.sigmoid(x) if sigmoid else jax.nn.softmax(x, axis=-1)
    if C > 0:
        a = pred[jnp.arange(B), target][:, None]
        a = (C - 1.0 / jnp.maximum(a, 1.0 / C)) / (C - 1.0)
    else:
        a = 1.0
    a = a * gamma
    return ((unif - (a * pred + (1.0 - a) * target_oh)) * x).sum(-1).mean()


if __name__ == "__main__":
    key = jax.random.PRNGKey(0)
    kx, kt = jax.random.split(key)

    # 1) sigmoid path, f32, single tile (batch=8, num_classes=32).
    B, N = 8, 32
    x = jax.random.normal(kx, (B, N), dtype=jnp.float32)
    target = jax.random.randint(kt, (B,), 0, N, dtype=jnp.int32)

    loss = jax.block_until_ready(
        output_bias_forget(x, target, C=2.0, gamma=1.0, sigmoid=True))
    ref = _reference(x, target, C=2.0, gamma=1.0, sigmoid=True)
    assert jnp.allclose(loss, ref, atol=1e-5, rtol=1e-4), (loss, ref)

    # 2) softmax path + C<0 (lambda=0) branch.
    loss_sm = jax.block_until_ready(
        output_bias_forget(x, target, C=4.0, gamma=0.5, sigmoid=False))
    ref_sm = _reference(x, target, C=4.0, gamma=0.5, sigmoid=False)
    assert jnp.allclose(loss_sm, ref_sm, atol=1e-5, rtol=1e-4), (loss_sm, ref_sm)

    loss_neg = jax.block_until_ready(
        output_bias_forget(x, target, C=-1.0, gamma=0.7, sigmoid=True))
    ref_neg = _reference(x, target, C=-1.0, gamma=0.7, sigmoid=True)
    assert jnp.allclose(loss_neg, ref_neg, atol=1e-5, rtol=1e-4), (loss_neg, ref_neg)

    # 3) bf16 input, class-tiled sigmoid path, 2-way "parallel" core axis.
    B2, N2 = 16, 256
    kx2, kt2 = jax.random.split(jax.random.PRNGKey(0))
    x2 = jax.random.normal(kx2, (B2, N2), dtype=jnp.float32).astype(jnp.bfloat16)
    t2 = jax.random.randint(kt2, (B2,), 0, N2, dtype=jnp.int32)
    loss2 = jax.block_until_ready(
        output_bias_forget(x2, t2, C=2.0, gamma=1.0, sigmoid=True, tb=8, tn=128))
    ref2 = _reference(x2, t2, C=2.0, gamma=1.0, sigmoid=True)
    assert jnp.allclose(loss2, ref2, atol=1e-4, rtol=1e-3), (loss2, ref2)

    print("KERNEL_OK")
</pallas_src>

<mosaic_0001>
module attributes {stable_mosaic.version = 11 : i64} {
  func.func @_obf_kernel(%arg0: i32, %arg1: i32, %arg2: i32, %arg3: memref<8x32xf32, #tpu.memory_space<vmem>>, %arg4: memref<8x1xi32, #tpu.memory_space<vmem>>, %arg5: memref<1x8x128xf32, #tpu.memory_space<vmem>>, %arg6: memref<8x1xf32, #tpu.memory_space<vmem>>, %arg7: memref<8x1xf32, #tpu.memory_space<vmem>>, %arg8: memref<8x1xf32, #tpu.memory_space<vmem>>, %arg9: memref<8x1xf32, #tpu.memory_space<vmem>>, %arg10: memref<8x1xf32, #tpu.memory_space<vmem>>) attributes {dimension_semantics = [#tpu.dimension_semantics<parallel>, #tpu.dimension_semantics<arbitrary>, #tpu.dimension_semantics<arbitrary>], iteration_bounds = array<i64: 1, 1, 1>, scalar_prefetch = 0 : i64, scratch_operands = 5 : i64, tpu.core_type = #tpu.core_type<tc>, window_params = [{transform_indices = @transform_0, window_bounds = array<i64: 8, 32>}, {transform_indices = @transform_1, window_bounds = array<i64: 8, 1>}, {transform_indices = @transform_2, window_bounds = array<i64: 1, 8, 128>}]} {
    %c0_i32 = arith.constant 0 : i32
    %0 = arith.cmpi eq, %arg1, %c0_i32 : i32
    %c0_i32_0 = arith.constant 0 : i32
    %1 = arith.cmpi eq, %arg2, %c0_i32_0 : i32
    %2 = arith.andi %0, %1 : i1
    %3 = arith.extui %2 : i1 to i32
    %c0_i32_1 = arith.constant 0 : i32
    %4 = arith.cmpi ne, %3, %c0_i32_1 : i32
    scf.if %4 {
      %cst_34 = arith.constant 0.000000e+00 : f32
      %54 = vector.broadcast %cst_34 : f32 to vector<8x1xf32>
      %c0_35 = arith.constant 0 : index
      %c0_36 = arith.constant 0 : index
      %55 = vector.load %arg10[%c0_35, %c0_36] : memref<8x1xf32, #tpu.memory_space<vmem>>, vector<8x1xf32>
      tpu.vector_store %arg10[%c0_35, %c0_36], %54 {strides = array<i32>} : memref<8x1xf32, #tpu.memory_space<vmem>>, vector<8x1xf32>,
    } else {
    }
    %c0_i32_2 = arith.constant 0 : i32
    %5 = arith.cmpi eq, %arg2, %c0_i32_2 : i32
    %6 = arith.extui %5 : i1 to i32
    %c0_i32_3 = arith.constant 0 : i32
    %7 = arith.cmpi ne, %6, %c0_i32_3 : i32
    scf.if %7 {
      %cst_34 = arith.constant 0.000000e+00 : f32
      %54 = vector.broadcast %cst_34 : f32 to vector<8x1xf32>
      %c0_35 = arith.constant 0 : index
      %c0_36 = arith.constant 0 : index
      %55 = vector.load %arg6[%c0_35, %c0_36] : memref<8x1xf32, #tpu.memory_space<vmem>>, vector<8x1xf32>
      tpu.vector_store %arg6[%c0_35, %c0_36], %54 {strides = array<i32>} : memref<8x1xf32, #tpu.memory_space<vmem>>, vector<8x1xf32>,
      %cst_37 = arith.constant 0.000000e+00 : f32
      %56 = vector.broadcast %cst_37 : f32 to vector<8x1xf32>
      %c0_38 = arith.constant 0 : index
      %c0_39 = arith.constant 0 : index
      %57 = vector.load %arg7[%c0_38, %c0_39] : memref<8x1xf32, #tpu.memory_space<vmem>>, vector<8x1xf32>
      tpu.vector_store %arg7[%c0_38, %c0_39], %56 {strides = array<i32>} : memref<8x1xf32, #tpu.memory_space<vmem>>, vector<8x1xf32>,
      %cst_40 = arith.constant 0.000000e+00 : f32
      %58 = vector.broadcast %cst_40 : f32 to vector<8x1xf32>
      %c0_41 = arith.constant 0 : index
      %c0_42 = arith.constant 0 : index
      %59 = vector.load %arg8[%c0_41, %c0_42] : memref<8x1xf32, #tpu.memory_space<vmem>>, vector<8x1xf32>
      tpu.vector_store %arg8[%c0_41, %c0_42], %58 {strides = array<i32>} : memref<8x1xf32, #tpu.memory_space<vmem>>, vector<8x1xf32>,
      %cst_43 = arith.constant 0.000000e+00 : f32
      %60 = vector.broadcast %cst_43 : f32 to vector<8x1xf32>
      %c0_44 = arith.constant 0 : index
      %c0_45 = arith.constant 0 : index
      %61 = vector.load %arg9[%c0_44, %c0_45] : memref<8x1xf32, #tpu.memory_space<vmem>>, vector<8x1xf32>
      tpu.vector_store %arg9[%c0_44, %c0_45], %60 {strides = array<i32>} : memref<8x1xf32, #tpu.memory_space<vmem>>, vector<8x1xf32>,
    } else {
    }
    %c0 = arith.constant 0 : index
    %c0_4 = arith.constant 0 : index
    %8 = vector.load %arg3[%c0, %c0_4] : memref<8x32xf32, #tpu.memory_space<vmem>>, vector<8x32xf32>
    %c0_5 = arith.constant 0 : index
    %c0_6 = arith.constant 0 : index
    %9 = vector.load %arg4[%c0_5, %c0_6] : memref<8x1xi32, #tpu.memory_space<vmem>>, vector<8x1xi32>
    %10 = tpu.iota {dimensions = array<i32: 1>} : vector<8x32xi32>
    %c32_i32 = arith.constant 32 : i32
    %11 = arith.muli %arg2, %c32_i32 : i32
    %12 = vector.broadcast %11 : i32 to vector<8x32xi32>
    %13 = arith.addi %10, %12 : vector<8x32xi32>
    %14 = vector.broadcast %9 : vector<8x1xi32> to vector<8x32xi32>
    %15 = arith.cmpi eq, %13, %14 : vector<8x32xi32>
    %16 = arith.negf %8 : vector<8x32xf32>
    %17 = math.exp %16 : vector<8x32xf32>
    %cst = arith.constant 1.000000e+00 : f32
    %18 = vector.broadcast %cst : f32 to vector<8x32xf32>
    %19 = arith.addf %18, %17 : vector<8x32xf32>
    %20 = arith.divf %18, %19 : vector<8x32xf32>
    %c0_7 = arith.constant 0 : index
    %c0_8 = arith.constant 0 : index
    %21 = vector.load %arg6[%c0_7, %c0_8] : memref<8x1xf32, #tpu.memory_space<vmem>>, vector<8x1xf32>
    %cst_9 = arith.constant dense<0.000000e+00> : vector<8xf32>
    %22 = vector.multi_reduction <add>, %8, %cst_9 [1] : vector<8x32xf32> to vector<8xf32>
    %23 = vector.shape_cast %22 : vector<8xf32> to vector<8x1xf32>
    %24 = arith.addf %21, %23 : vector<8x1xf32>
    %c0_10 = arith.constant 0 : index
    %c0_11 = arith.constant 0 : index
    %25 = vector.load %arg6[%c0_10, %c0_11] : memref<8x1xf32, #tpu.memory_space<vmem>>, vector<8x1xf32>
    tpu.vector_store %arg6[%c0_10, %c0_11], %24 {strides = array<i32>} : memref<8x1xf32, #tpu.memory_space<vmem>>, vector<8x1xf32>,
    %c0_12 = arith.constant 0 : index
    %c0_13 = arith.constant 0 : index
    %26 = vector.load %arg7[%c0_12, %c0_13] : memref<8x1xf32, #tpu.memory_space<vmem>>, vector<8x1xf32>
    %27 = arith.mulf %20, %8 : vector<8x32xf32>
    %cst_14 = arith.constant dense<0.000000e+00> : vector<8xf32>
    %28 = vector.multi_reduction <add>, %27, %cst_14 [1] : vector<8x32xf32> to vector<8xf32>
    %29 = vector.shape_cast %28 : vector<8xf32> to vector<8x1xf32>
    %30 = arith.addf %26, %29 : vector<8x1xf32>
    %c0_15 = arith.constant 0 : index
    %c0_16 = arith.constant 0 : index
    %31 = vector.load %arg7[%c0_15, %c0_16] : memref<8x1xf32, #tpu.memory_space<vmem>>, vector<8x1xf32>
    tpu.vector_store %arg7[%c0_15, %c0_16], %30 {strides = array<i32>} : memref<8x1xf32, #tpu.memory_space<vmem>>, vector<8x1xf32>,
    %c0_17 = arith.constant 0 : index
    %c0_18 = arith.constant 0 : index
    %32 = vector.load %arg8[%c0_17, %c0_18] : memref<8x1xf32, #tpu.memory_space<vmem>>, vector<8x1xf32>
    %cst_19 = arith.constant 0.000000e+00 : f32
    %33 = vector.broadcast %cst_19 : f32 to vector<8x32xf32>
    %34 = arith.select %15, %8, %33 : vector<8x32xi1>, vector<8x32xf32>
    %cst_20 = arith.constant dense<0.000000e+00> : vector<8xf32>
    %35 = vector.multi_reduction <add>, %34, %cst_20 [1] : vector<8x32xf32> to vector<8xf32>
    %36 = vector.shape_cast %35 : vector<8xf32> to vector<8x1xf32>
    %37 = arith.addf %32, %36 : vector<8x1xf32>
    %c0_21 = arith.constant 0 : index
    %c0_22 = arith.constant 0 : index
    %38 = vector.load %arg8[%c0_21, %c0_22] : memref<8x1xf32, #tpu.memory_space<vmem>>, vector<8x1xf32>
    tpu.vector_store %arg8[%c0_21, %c0_22], %37 {strides = array<i32>} : memref<8x1xf32, #tpu.memory_space<vmem>>, vector<8x1xf32>,
    %c0_23 = arith.constant 0 : index
    %c0_24 = arith.constant 0 : index
    %39 = vector.load %arg9[%c0_23, %c0_24] : memref<8x1xf32, #tpu.memory_space<vmem>>, vector<8x1xf32>
    %cst_25 = arith.constant 0.000000e+00 : f32
    %40 = vector.broadcast %cst_25 : f32 to vector<8x32xf32>
    %41 = arith.select %15, %20, %40 : vector<8x32xi1>, vector<8x32xf32>
    %cst_26 = arith.constant dense<0.000000e+00> : vector<8xf32>
    %42 = vector.multi_reduction <add>, %41, %cst_26 [1] : vector<8x32xf32> to vector<8xf32>
    %43 = vector.shape_cast %42 : vector<8xf32> to vector<8x1xf32>
    %44 = arith.addf %39, %43 : vector<8x1xf32>
    %c0_27 = arith.constant 0 : index
    %c0_28 = arith.constant 0 : index
    %45 = vector.load %arg9[%c0_27, %c0_28] : memref<8x1xf32, #tpu.memory_space<vmem>>, vector<8x1xf32>
    tpu.vector_store %arg9[%c0_27, %c0_28], %44 {strides = array<i32>} : memref<8x1xf32, #tpu.memory_space<vmem>>, vector<8x1xf32>,
    %c0_i32_29 = arith.constant 0 : i32
    %46 = arith.cmpi eq, %arg2, %c0_i32_29 : i32
    %47 = arith.extui %46 : i1 to i32
    %c0_i32_30 = arith.constant 0 : i32
    %48 = arith.cmpi ne, %47, %c0_i32_30 : i32
    scf.if %48 {
      %c0_34 = arith.constant 0 : index
      %c0_35 = arith.constant 0 : index
      %54 = vector.load %arg9[%c0_34, %c0_35] : memref<8x1xf32, #tpu.memory_space<vmem>>, vector<8x1xf32>
      %cst_36 = arith.constant 5.000000e-01 : f32
      %55 = vector.broadcast %cst_36 : f32 to vector<8x1xf32>
      %56 = arith.maximumf %54, %55 : vector<8x1xf32>
      %cst_37 = arith.constant 1.000000e+00 : f32
      %57 = vector.broadcast %cst_37 : f32 to vector<8x1xf32>
      %58 = arith.divf %57, %56 : vector<8x1xf32>
      %cst_38 = arith.constant 2.000000e+00 : f32
      %59 = vector.broadcast %cst_38 : f32 to vector<8x1xf32>
      %60 = arith.subf %59, %58 : vector<8x1xf32>
      %cst_39 = arith.constant 1.000000e+00 : f32
      %61 = vector.broadcast %cst_39 : f32 to vector<8x1xf32>
      %62 = arith.divf %60, %61 : vector<8x1xf32>
      %cst_40 = arith.constant 1.000000e+00 : f32
      %63 = vector.broadcast %cst_40 : f32 to vector<8x1xf32>
      %64 = arith.mulf %62, %63 : vector<8x1xf32>
      %c0_41 = arith.constant 0 : index
      %c0_42 = arith.constant 0 : index
      %65 = vector.load %arg6[%c0_41, %c0_42] : memref<8x1xf32, #tpu.memory_space<vmem>>, vector<8x1xf32>
      %cst_43 = arith.constant 3.125000e-02 : f32
      %66 = vector.broadcast %cst_43 : f32 to vector<8x1xf32>
      %67 = arith.mulf %65, %66 : vector<8x1xf32>
      %c0_44 = arith.constant 0 : index
      %c0_45 = arith.constant 0 : index
      %68 = vector.load %arg7[%c0_44, %c0_45] : memref<8x1xf32, #tpu.memory_space<vmem>>, vector<8x1xf32>
      %69 = arith.mulf %64, %68 : vector<8x1xf32>
      %70 = arith.subf %67, %69 : vector<8x1xf32>
      %cst_46 = arith.constant 1.000000e+00 : f32
      %71 = vector.broadcast %cst_46 : f32 to vector<8x1xf32>
      %72 = arith.subf %71, %64 : vector<8x1xf32>
      %c0_47 = arith.constant 0 : index
      %c0_48 = arith.constant 0 : index
      %73 = vector.load %arg8[%c0_47, %c0_48] : memref<8x1xf32, #tpu.memory_space<vmem>>, vector<8x1xf32>
      %74 = arith.mulf %72, %73 : vector<8x1xf32>
      %75 = arith.subf %70, %74 : vector<8x1xf32>
      %c0_49 = arith.constant 0 : index
      %c0_50 = arith.constant 0 : index
      %76 = vector.load %arg10[%c0_49, %c0_50] : memref<8x1xf32, #tpu.memory_space<vmem>>, vector<8x1xf32>
      %77 = arith.addf %76, %75 : vector<8x1xf32>
      %c0_51 = arith.constant 0 : index
      %c0_52 = arith.constant 0 : index
      %78 = vector.load %arg10[%c0_51, %c0_52] : memref<8x1xf32, #tpu.memory_space<vmem>>, vector<8x1xf32>
      tpu.vector_store %arg10[%c0_51, %c0_52], %77 {strides = array<i32>} : memref<8x1xf32, #tpu.memory_space<vmem>>, vector<8x1xf32>,
    } else {
    }
    %c0_i32_31 = arith.constant 0 : i32
    %49 = arith.cmpi eq, %arg1, %c0_i32_31 : i32
    %c0_i32_32 = arith.constant 0 : i32
    %50 = arith.cmpi eq, %arg2, %c0_i32_32 : i32
    %51 = arith.andi %49, %50 : i1
    %52 = arith.extui %51 : i1 to i32
    %c0_i32_33 = arith.constant 0 : i32
    %53 = arith.cmpi ne, %52, %c0_i32_33 : i32
    scf.if %53 {
      %c0_34 = arith.constant 0 : index
      %c0_35 = arith.constant 0 : index
      %54 = vector.load %arg10[%c0_34, %c0_35] : memref<8x1xf32, #tpu.memory_space<vmem>>, vector<8x1xf32>
      %55 = vector.shape_cast %54 : vector<8x1xf32> to vector<1x8x1xf32>
      %cst_36 = arith.constant dense<0.000000e+00> : vector<1xf32>
      %56 = vector.multi_reduction <add>, %55, %cst_36 [1, 2] : vector<1x8x1xf32> to vector<1xf32>
      %57 = vector.shape_cast %56 : vector<1xf32> to vector<1x1x1xf32>
      %58 = vector.extract %57[0, 0, 0] : f32 from vector<1x1x1xf32>
      %59 = vector.broadcast %58 : f32 to vector<1x8x128xf32>
      %c0_37 = arith.constant 0 : index
      %c0_38 = arith.constant 0 : index
      %c0_39 = arith.constant 0 : index
      %60 = vector.load %arg5[%c0_37, %c0_38, %c0_39] : memref<1x8x128xf32, #tpu.memory_space<vmem>>, vector<1x8x128xf32>
      tpu.vector_store %arg5[%c0_37, %c0_38, %c0_39], %59 {strides = array<i32>} : memref<1x8x128xf32, #tpu.memory_space<vmem>>, vector<1x8x128xf32>,
    } else {
    }
    return
  }
  func.func @transform_0(%arg0: i32, %arg1: i32, %arg2: i32) -> (i32, i32) {
    %c1_i32 = arith.constant 1 : i32
    %0 = arith.muli %arg0, %c1_i32 : i32
    %1 = arith.addi %0, %arg1 : i32
    %c0_i32 = arith.constant 0 : i32
    return %1, %arg2 : i32, i32
  }
  func.func @transform_1(%arg0: i32, %arg1: i32, %arg2: i32) -> (i32, i32) {
    %c1_i32 = arith.constant 1 : i32
    %0 = arith.muli %arg0, %c1_i32 : i32
    %1 = arith.addi %0, %arg1 : i32
    %c0_i32 = arith.constant 0 : i32
    %c0_i32_0 = arith.constant 0 : i32
    return %1, %c0_i32 : i32, i32
  }
  func.func @transform_2(%arg0: i32, %arg1: i32, %arg2: i32) -> (i32, i32, i32) {
    %c0_i32 = arith.constant 0 : i32
    %c0_i32_0 = arith.constant 0 : i32
    %c0_i32_1 = arith.constant 0 : i32
    return %arg0, %c0_i32, %c0_i32_0 : i32, i32, i32
  }
}

</mosaic_0001>

<llo_original>
// kernel: tpu_custom_call.1
$region0: #{tpu_custom_call.1}
  #allocation0 [shape = 'u32[]', space=smem, size = 0x4, offset = 0x4, fixed_abs, tag = 'smem constant byte address 0x4 - core index']
  #allocation1 [shape = 'u32[144,128]{1,0:T(1,128)}', space=vmem, size = 0x12000, scoped, tag = 'internal scratch']
  #allocation2 [shape = 'f32[8,1]{1,0:T(8,128)}', space=vmem, size = 0x1000, scoped, tag = 'scratch operand']
  #allocation3 [shape = 'f32[8,1]{1,0:T(8,128)}', space=vmem, size = 0x1000, scoped, tag = 'scratch operand']
  #allocation4 [shape = 'f32[8,1]{1,0:T(8,128)}', space=vmem, size = 0x1000, scoped, tag = 'scratch operand']
  #allocation5 [shape = 'f32[8,1]{1,0:T(8,128)}', space=vmem, size = 0x1000, scoped, tag = 'scratch operand']
  #allocation6 [shape = 'f32[8,1]{1,0:T(8,128)}', space=vmem, size = 0x1000, scoped, tag = 'scratch operand']
  %s0 = inlined_call_operand.vmem [shape: f32[8,32], index: 0, kind: input, shape index: {}]
  %s1 = inlined_call_operand.vmem [shape: s32[8,1], index: 1, kind: input, shape index: {}]
  %s2 = inlined_call_operand.hbm [shape: f32[1,8,128], index: 2, kind: output, shape index: {}]
  %s3 = sld [smem:[#allocation0]]
  $region34: #{tpu_custom_call.1} parent=0
    _
  %s5 = ssub.s32 1, %s3
  %s6 = scalar_select 0, %s5, %s3
  $region1: #{tpu_custom_call.1} parent=0
    #allocation7 [shape = 'u8[4096]{0}', space=vmem, size = 0x1000, scoped, tag = 'output window, operand 0, single buffered']
    #allocation8 [shape = 's32[1]{0}', space=sflag, size = 0x4, scoped, tag = 'scoped memory for tpu_custom_call.1']
    %7 = vsyncpa [#allocation8], 0
    // Predicated region
    $region2: #{tpu_custom_call.1} parent=1 // pred_check
      _
    $region3: #{tpu_custom_call.1} parent=1 // pred_check_branch
      %9 = sbr.rel (0) target = $region5
    $region4: #{tpu_custom_call.1} parent=1 // pred_region
      %s10 = sadd.s32 0, 0
      %p11 = scmp.lt.s32.totalorder %s10, 0
      %s12 = scalar_select %p11, %s10, 0
      %s13 = smul.addr %s12, 8
      %s14 = scalar_lea.vmem %s0, %s13
      %s15 = sadd.s32 0, 0
    $region5: #{tpu_custom_call.1} parent=1 // pred_fallthru
      _
    // Predicated region
    $region6: #{tpu_custom_call.1} parent=1 // pred_check
      _
    $region7: #{tpu_custom_call.1} parent=1 // pred_check_branch
      %17 = sbr.rel (0) target = $region9
    $region8: #{tpu_custom_call.1} parent=1 // pred_region
      %s18 = sadd.s32 0, 0
      %p19 = scmp.lt.s32.totalorder %s18, 0
      %s20 = scalar_select %p19, %s18, 0
      %s21 = smul.addr %s20, 8
      %s22 = scalar_lea.vmem %s1, %s21
      %s23 = sadd.s32 0, 0
    $region9: #{tpu_custom_call.1} parent=1 // pred_fallthru
      _
    %s24 = sadd.s32 0, 0
    %p25 = scmp.lt.s32.totalorder %s24, 0
    %s26 = scalar_select %p25, %s24, 0
    %s27 = smul.addr %s26, 8
    %s28 = scalar_lea.vmem %s0, %s27
    %s29 = sadd.s32 0, 0
    %p30 = scmp.lt.s32.totalorder %s29, 0
    %s31 = scalar_select %p30, %s29, 0
    %s32 = smul.addr %s31, 8
    %s33 = scalar_lea.vmem %s1, %s32
    %s34 = sadd.s32 0, 0
    %p35 = scmp.lt.s32.totalorder %s34, 0
    %s36 = scalar_select %p35, %s34, 0
    %s37 = smul.addr %s36, 8
    %s38 = scalar_lea.vmem %s0, %s37
    %s39 = sadd.s32 0, 0
    %s40 = sadd.s32 0, 0
    %p41 = scmp.lt.s32.totalorder %s40, 0
    %s42 = scalar_select %p41, %s40, 0
    %s43 = smul.addr %s42, 8
    %s44 = scalar_lea.vmem %s1, %s43
    %s45 = sadd.s32 0, 0
    %p46 = scmp.eq.s32.totalorder 0, 0
    %p47 = scmp.eq.s32.totalorder 0, 0
    %p48 = pnand %p46, %p47
    %p49 = pneg %p48
    // Predicated region
    $region10: #{tpu_custom_call.1} parent=1 // pred_check
      _
    $region11: #{tpu_custom_call.1} parent=1 // pred_check_branch
      %51 = sbr.rel (%p48) target = $region13
    $region12: #{tpu_custom_call.1} parent=1 // pred_region
      %vm52 = vcmask 7168
      %53 = vst.msk [vmem:[#allocation6] sm:$0xff] %vm52, 0.0
    $region13: #{tpu_custom_call.1} parent=1 // pred_fallthru
      _
    // Predicated region
    $region14: #{tpu_custom_call.1} parent=1 // pred_check
      %p54 = pneg %p47
    $region15: #{tpu_custom_call.1} parent=1 // pred_check_branch
      %56 = sbr.rel (%p54) target = $region17
    $region16: #{tpu_custom_call.1} parent=1 // pred_region
      %vm57 = vcmask 7168
      %58 = vst.msk [vmem:[#allocation2] sm:$0xff] %vm57, 0.0
      %59 = vst.msk [vmem:[#allocation3] sm:$0xff] %vm57, 0.0
      %60 = vst.msk [vmem:[#allocation4] sm:$0xff] %vm57, 0.0
      %61 = vst.msk [vmem:[#allocation5] sm:$0xff] %vm57, 0.0
    $region17: #{tpu_custom_call.1} parent=1 // pred_fallthru
      _
    %v62 = vld [vmem:[%s38] sm:$0xff]
    %v63 = vld [vmem:[%s44] sm:$0xff]
    %v64 = vlaneseq
    %v65 = vand.u32 %v64, 127
    %s66 = smul.u32 0, 32
    %v67 = vstv %s66
    %v68 = vadd.s32 %v65, %v67
    %69 = vset.pattern.permute.xlu0 0
    %70 = vperm.xlu0 %69, %v63
    %v71 = vpop.permute.xlu0 %70
    %vm72 = vcmp.eq.s32.totalorder %v68, %v71
    %v73 = vxor.u32 %v62, 2147483648
    %v74 = vmul.f32 %v73, 1.442695
    %v75 = vpow.pop %v74
    %v76 = vadd.f32 %v75, 1.0
    %v77 = vrcp.pop %v76
    %v78 = vmul.f32 1.0, %v77
    %v79 = vld [vmem:[#allocation2] sm:$0xff]
    %vm80 = vcmask 261120
    %v81 = vsel %vm80, %v62, 0.0
    %82 = vadd.xlane.f32.xlu0 %v81
    %v83 = vpop.xlane.xlu0 %82
    %v84 = vadd.f32 %v79, %v83
    %vm85 = vcmask 7168
    %86 = vst.msk [vmem:[#allocation2] sm:$0xff] %vm85, %v84
    %v87 = vld [vmem:[#allocation3] sm:$0xff]
    %v88 = vmul.f32 %v78, %v62
    %v89 = vsel %vm80, %v88, 0.0
    %90 = vadd.xlane.f32.xlu0 %v89
    %v91 = vpop.xlane.xlu0 %90
    %v92 = vadd.f32 %v87, %v91
    %93 = vst.msk [vmem:[#allocation3] sm:$0xff] %vm85, %v92
    %v94 = vld [vmem:[#allocation4] sm:$0xff]
    %v95 = vsel %vm72, %v62, 0.0
    %v96 = vsel %vm80, %v95, 0.0
    %97 = vadd.xlane.f32.xlu0 %v96
    %v98 = vpop.xlane.xlu0 %97
    %v99 = vadd.f32 %v94, %v98
    %100 = vst.msk [vmem:[#allocation4] sm:$0xff] %vm85, %v99
    %v101 = vld [vmem:[#allocation5] sm:$0xff]
    %v102 = vsel %vm72, %v78, 0.0
    %v103 = vsel %vm80, %v102, 0.0
    %104 = vadd.xlane.f32.xlu0 %v103
    %v105 = vpop.xlane.xlu0 %104
    %v106 = vadd.f32 %v101, %v105
    %107 = vst.msk [vmem:[#allocation5] sm:$0xff] %vm85, %v106
    // Predicated region
    $region18: #{tpu_custom_call.1} parent=1 // pred_check
      %p108 = pneg %p47
    $region19: #{tpu_custom_call.1} parent=1 // pred_check_branch
      %110 = sbr.rel (%p108) target = $region21
    $region20: #{tpu_custom_call.1} parent=1 // pred_region
      %v111 = vld [vmem:[#allocation5] sm:$0xff]
      %v112 = vmax.f32 %v111, 0.5
      %v113 = vrcp.pop %v112
      %v114 = vmul.f32 1.0, %v113
      %v115 = vsub.f32 2.0, %v114
      %v116 = vld [vmem:[#allocation2] sm:$0xff]
      %v117 = vmul.f32 %v116, 0.03125
      %v118 = vld [vmem:[#allocation3] sm:$0xff]
      %v119 = vmul.f32 %v115, %v118
      %v120 = vsub.f32 %v117, %v119
      %v121 = vsub.f32 1.0, %v115
      %v122 = vld [vmem:[#allocation4] sm:$0xff]
      %v123 = vmul.f32 %v121, %v122
      %v124 = vsub.f32 %v120, %v123
      %v125 = vld [vmem:[#allocation6] sm:$0xff]
      %v126 = vadd.f32 %v125, %v124
      %127 = vst.msk [vmem:[#allocation6] sm:$0xff] %vm85, %v126
    $region21: #{tpu_custom_call.1} parent=1 // pred_fallthru
      _
    // Predicated region
    $region22: #{tpu_custom_call.1} parent=1 // pred_check
      _
    $region23: #{tpu_custom_call.1} parent=1 // pred_check_branch
      %129 = sbr.rel (%p48) target = $region25
    $region24: #{tpu_custom_call.1} parent=1 // pred_region
      %v130 = vld [vmem:[#allocation6] sm:$0xff]
      %v131 = vsel %vm85, %v130, 0.0
      %132 = vadd.xlane.f32.xlu0 %v131
      %v133 = vpop.xlane.xlu0 %132
      %v134 = vrot.slane %v133, 4
      %v135 = vadd.f32 %v133, %v134
      %v136 = vrot.slane %v135, 2
      %v137 = vadd.f32 %v135, %v136
      %v138 = vrot.slane %v137, 1
      %v139 = vadd.f32 %v137, %v138
      %s140 = vtos %v139
      %v141 = vstv %s140
      %142 = vst [vmem:[#allocation7] sm:$0xff] %v141
    $region25: #{tpu_custom_call.1} parent=1 // pred_fallthru
      _
    // Predicated region
    $region26: #{tpu_custom_call.1} parent=1 // pred_check
      _
    $region27: #{tpu_custom_call.1} parent=1 // pred_check_branch
      %144 = sbr.rel (0) target = $region29
    $region28: #{tpu_custom_call.1} parent=1 // pred_region
      %s146 = ssub.s32 128, 128
      %147 = vsyncadd [#allocation8], %s146
      %s149 = sshll.u32 [#allocation7], 4
      %s150 = int_to_ptr.vmem [resolvable:$true] %s149
      %152 = dma.vmem_to_hbm [thread:$0]  %s150, 128, %s2, [#allocation8]
    $region29: #{tpu_custom_call.1} parent=1 // pred_fallthru
      _
    // Predicated region
    $region30: #{tpu_custom_call.1} parent=1 // pred_check
      _
    $region31: #{tpu_custom_call.1} parent=1 // pred_check_branch
      %154 = sbr.rel (0) target = $region33
    $region32: #{tpu_custom_call.1} parent=1 // pred_region
      %155 = dma.done [#allocation8], 128
    $region33: #{tpu_custom_call.1} parent=1 // pred_fallthru
      _
    %156 = vsyncpa [#allocation8], 1

</llo_original>
